<compile_context>
chip_gen: v5e
topology: v5e:2x2
jax: 0.10.0
libtpu: 0.0.40
codegen_flags: <defaults>
</compile_context>

<pallas_src>
import jax
import jax.numpy as jnp
from jax.experimental import pallas as pl
from jax.experimental.pallas import tpu as pltpu

LANE = 128      # TPU lane width; matmul / output widths are padded to this.
SUBLANE = 8     # sublane granularity for f32 row blocks.

_FUSED_VMEM_BUDGET = 40 * 1024 * 1024   # fuse only if est. footprint fits this
_TILED_VMEM_BUDGET = 40 * 1024 * 1024   # shrink tile_n until this is met
_MAX_FUSED_N = 512                      # beyond this prefer the parallel grid


def _round_up(x, m):
    return ((x + m - 1) // m) * m


def _pad2d(a, rows, cols):
    """Zero-pad a 2-D array up to (rows, cols)."""
    pr = rows - a.shape[0]
    pc = cols - a.shape[1]
    if pr == 0 and pc == 0:
        return a
    return jnp.pad(a, ((0, pr), (0, pc)))


# ---------------------------------------------------------------------------
# Fused kernel (small-N regime): whole two-layer forward in one grid step.
# Matmul operands stay in the (possibly bf16) storage dtype; accumulation,
# bias add and relu are f32.
# ---------------------------------------------------------------------------
def _gcn_fused_kernel(adj_ref, x_ref, w1_ref, b1_ref, w2_ref, b2_ref, out_ref):
    mm = adj_ref.dtype
    s1 = jnp.dot(x_ref[...], w1_ref[...], preferred_element_type=jnp.float32)
    h = jnp.maximum(
        jnp.dot(adj_ref[...], s1.astype(mm), preferred_element_type=jnp.float32)
        + b1_ref[...],
        0.0,
    )
    s2 = jnp.dot(h.astype(mm), w2_ref[...], preferred_element_type=jnp.float32)
    out_ref[...] = (
        jnp.dot(adj_ref[...], s2.astype(mm), preferred_element_type=jnp.float32)
        + b2_ref[...]
    ).astype(out_ref.dtype)


def _gcn_fused(adjacency, feature, w1p, b1p, w2p, b2p, *, vmem_limit_bytes):
    n, d_pad = feature.shape
    h_pad = w1p.shape[1]
    c_pad = w2p.shape[1]
    return pl.pallas_call(
        _gcn_fused_kernel,
        out_shape=jax.ShapeDtypeStruct((n, c_pad), jnp.float32),
        grid_spec=pltpu.PrefetchScalarGridSpec(
            num_scalar_prefetch=0,
            grid=(1,),  # everything resident; single step, no pipeline overhead
            in_specs=[
                pl.BlockSpec((n, n), lambda i: (0, 0)),          # A
                pl.BlockSpec((n, d_pad), lambda i: (0, 0)),      # X (lane-padded)
                pl.BlockSpec((d_pad, h_pad), lambda i: (0, 0)),  # W1
                pl.BlockSpec((1, h_pad), lambda i: (0, 0)),      # b1 (f32)
                pl.BlockSpec((h_pad, c_pad), lambda i: (0, 0)),  # W2
                pl.BlockSpec((1, c_pad), lambda i: (0, 0)),      # b2 (f32)
            ],
            out_specs=pl.BlockSpec((n, c_pad), lambda i: (0, 0)),
        ),
        compiler_params=pltpu.CompilerParams(
            dimension_semantics=("arbitrary",),
            vmem_limit_bytes=vmem_limit_bytes,
        ),
    )(adjacency, feature, w1p, b1p, w2p, b2p)


# ---------------------------------------------------------------------------
# Row-tiled kernels (large-N regime). S1 = X @ W1 is hoisted to the wrapper.
# Layer 1 emits S2 = relu(A[tile,:] @ S1 + b1) @ W2 directly (h never hits HBM);
# layer 2 computes logits = A[tile,:] @ S2 + b2.  Row blocks are independent,
# so the grid axis is "parallel" (shards across both TensorCores on v7x).
# ---------------------------------------------------------------------------
def _layer1_kernel(adj_ref, s1_ref, b1_ref, w2_ref, out_ref):
    mm = adj_ref.dtype
    h = jnp.maximum(
        jnp.dot(adj_ref[...], s1_ref[...], preferred_element_type=jnp.float32)
        + b1_ref[...],
        0.0,
    )
    out_ref[...] = jnp.dot(
        h.astype(mm), w2_ref[...], preferred_element_type=jnp.float32
    ).astype(out_ref.dtype)


def _layer2_kernel(adj_ref, s2_ref, b2_ref, out_ref):
    out_ref[...] = (
        jnp.dot(adj_ref[...], s2_ref[...], preferred_element_type=jnp.float32)
        + b2_ref[...]
    ).astype(out_ref.dtype)


def _gcn_tiled(adjacency, s1, b1p, w2p, b2p, *, tile_n, vmem_limit_bytes):
    n_pad = adjacency.shape[0]
    h_pad = s1.shape[1]
    c_pad = w2p.shape[1]
    grid = (n_pad // tile_n,)
    cparams = pltpu.CompilerParams(
        dimension_semantics=("parallel",),
        vmem_limit_bytes=vmem_limit_bytes,
    )

    # Layer 1 (+ fused layer-2 support matmul): S2 stays in the matmul dtype.
    s2 = pl.pallas_call(
        _layer1_kernel,
        out_shape=jax.ShapeDtypeStruct((n_pad, c_pad), adjacency.dtype),
        grid_spec=pltpu.PrefetchScalarGridSpec(
            num_scalar_prefetch=0,
            grid=grid,
            in_specs=[
                pl.BlockSpec((tile_n, n_pad), lambda i: (i, 0)),  # row block of A
                pl.BlockSpec((n_pad, h_pad), lambda i: (0, 0)),   # resident S1
                pl.BlockSpec((1, h_pad), lambda i: (0, 0)),       # b1 (f32)
                pl.BlockSpec((h_pad, c_pad), lambda i: (0, 0)),   # W2 (resident)
            ],
            out_specs=pl.BlockSpec((tile_n, c_pad), lambda i: (i, 0)),
        ),
        compiler_params=cparams,
    )(adjacency, s1, b1p, w2p)

    # Layer 2 aggregation.
    return pl.pallas_call(
        _layer2_kernel,
        out_shape=jax.ShapeDtypeStruct((n_pad, c_pad), jnp.float32),
        grid_spec=pltpu.PrefetchScalarGridSpec(
            num_scalar_prefetch=0,
            grid=grid,
            in_specs=[
                pl.BlockSpec((tile_n, n_pad), lambda i: (i, 0)),  # row block of A
                pl.BlockSpec((n_pad, c_pad), lambda i: (0, 0)),   # resident S2
                pl.BlockSpec((1, c_pad), lambda i: (0, 0)),       # b2 (f32)
            ],
            out_specs=pl.BlockSpec((tile_n, c_pad), lambda i: (i, 0)),
        ),
        compiler_params=cparams,
    )(adjacency, s2, b2p)


# ---------------------------------------------------------------------------
# GcnNet forward wrapper.
# ---------------------------------------------------------------------------
def gcn_net(adjacency, feature, w1, b1, w2, b2, *, fuse=None, tile_n=256,
            use_bf16=True):
    """GcnNet.forward: relu(gcn1(A, X)) -> gcn2(A, h)."""
    n, d_in = feature.shape
    h_dim = w1.shape[1]
    c_dim = w2.shape[1]

    mm_dtype = jnp.bfloat16 if use_bf16 else jnp.float32
    itemsize = jnp.dtype(mm_dtype).itemsize

    d_pad = _round_up(d_in, LANE)
    h_pad = _round_up(h_dim, LANE)
    c_pad = _round_up(c_dim, LANE)

    # Zero padding is exact: padded X columns meet zero W1 rows, padded hidden
    # columns of h are relu(0 + 0) = 0 and meet zero W2 rows, and padded logit
    # columns / rows are sliced off at the end.
    w1p = _pad2d(w1, d_pad, h_pad).astype(mm_dtype)
    w2p = _pad2d(w2, h_pad, c_pad).astype(mm_dtype)
    b1p = _pad2d(b1.reshape(1, -1).astype(jnp.float32), 1, h_pad)
    b2p = _pad2d(b2.reshape(1, -1).astype(jnp.float32), 1, c_pad)

    # Fused-kernel footprint: 2x-buffered operand blocks + f32 output block
    # (x2) + in-kernel temporaries (s1, h, s2 in f32 plus their mm-dtype casts).
    fused_bytes = (
        2 * itemsize * (n * n + n * d_pad + d_pad * h_pad + h_pad * c_pad)
        + 2 * 4 * (h_pad + c_pad)
        + 2 * 4 * n * c_pad
        + 4 * n * (2 * h_pad + c_pad)
        + itemsize * n * (h_pad + c_pad)
    )
    if fuse is None:
        # Single-step fused kernel runs on one TensorCore only: use it while N
        # is small and everything fits VMEM comfortably; otherwise prefer the
        # row-parallel tiled path (2 TCs on v7x, bounded footprint).
        fuse = (n <= _MAX_FUSED_N) and (fused_bytes <= _FUSED_VMEM_BUDGET)

    if fuse:
        a_mm = adjacency.astype(mm_dtype)
        x_p = _pad2d(feature, n, d_pad).astype(mm_dtype)
        vmem_limit = int(min(max(fused_bytes + (4 << 20), 32 << 20), 56 << 20))
        logits_p = _gcn_fused(a_mm, x_p, w1p, b1p, w2p, b2p,
                              vmem_limit_bytes=vmem_limit)
        return logits_p[:, :c_dim]

    # ---- Row-tiled path (arbitrary N). ----
    tile_n = max(SUBLANE, _round_up(min(tile_n, _round_up(n, SUBLANE)), SUBLANE))

    def tiled_bytes(t):
        n_p = _round_up(n, t)
        return (
            2 * itemsize * (t * n_p + n_p * h_pad + h_pad * c_pad + t * c_pad)
            + 2 * 4 * (h_pad + c_pad)
            + 2 * 4 * t * c_pad
            + 4 * t * (h_pad + c_pad)
        )

    # Shrink the row tile until the per-step footprint fits the VMEM budget
    # (matters on v5e's 16 MiB default scoped VMEM / v7x's 64 MiB physical);
    # 128-wide outputs already fully feed the MXU, so shrinking is cheap.
    while tile_n > LANE and tiled_bytes(tile_n) > _TILED_VMEM_BUDGET:
        tile_n = max(LANE, _round_up(tile_n // 2, SUBLANE))

    n_pad = _round_up(n, tile_n)
    a_p = _pad2d(adjacency, n_pad, n_pad).astype(mm_dtype)
    x_p = _pad2d(feature, n_pad, d_pad).astype(mm_dtype)
    # Support matmul S1 = X @ W1 hoisted to XLA (dense, lane-aligned, tiny).
    s1 = jnp.dot(x_p, w1p, preferred_element_type=jnp.float32).astype(mm_dtype)
    vmem_limit = int(min(max(tiled_bytes(tile_n) + (4 << 20), 32 << 20), 56 << 20))
    logits_p = _gcn_tiled(a_p, s1, b1p, w2p, b2p,
                          tile_n=tile_n, vmem_limit_bytes=vmem_limit)
    return logits_p[:n, :c_dim]


if __name__ == "__main__":
    # Small shapes consistent with the module (original input_dim=1433 shrunk
    # for the demo): N nodes, input dim D, hidden 16, classes 7.  N and D are
    # deliberately NOT multiples of 128 to exercise the padding paths.
    N, D, H, C = 208, 96, 16, 7

    key = jax.random.PRNGKey(0)
    k_adj, k_x, k_w1, k_b1, k_w2, k_b2 = jax.random.split(key, 6)

    # Deterministic synthetic graph: sparse random edges + self loops,
    # symmetric-normalized (D^-1/2 A D^-1/2), stored dense.
    edges = (jax.random.uniform(k_adj, (N, N)) < 0.05).astype(jnp.float32)
    a = jnp.minimum(jnp.maximum(edges, edges.T) + jnp.eye(N, dtype=jnp.float32), 1.0)
    d_inv_sqrt = 1.0 / jnp.sqrt(a.sum(axis=1))
    adjacency = a * d_inv_sqrt[:, None] * d_inv_sqrt[None, :]

    feature = jax.random.normal(k_x, (N, D), dtype=jnp.float32)

    # Deterministic parameter init (glorot-ish scaling, small biases).
    w1 = jax.random.normal(k_w1, (D, H), dtype=jnp.float32) * (1.0 / jnp.sqrt(D))
    b1 = jax.random.normal(k_b1, (H,), dtype=jnp.float32) * 0.01
    w2 = jax.random.normal(k_w2, (H, C), dtype=jnp.float32) * (1.0 / jnp.sqrt(H))
    b2 = jax.random.normal(k_b2, (C,), dtype=jnp.float32) * 0.01

    # Pure-JAX f32 reference of the exact forward semantics.
    ref_h = jnp.maximum(adjacency @ (feature @ w1) + b1, 0.0)
    ref_logits = adjacency @ (ref_h @ w2) + b2

    # Exact-precision fused path (f32 operands): tight tolerance.
    logits_f32 = gcn_net(adjacency, feature, w1, b1, w2, b2, use_bf16=False)
    jax.block_until_ready(logits_f32)
    assert logits_f32.shape == (N, C)
    assert jnp.allclose(logits_f32, ref_logits, atol=5e-4, rtol=5e-4), "f32 fused mismatch"

    # Default path: bf16 operands + f32 accumulation (bf16 error scale ~1e-2).
    logits = gcn_net(adjacency, feature, w1, b1, w2, b2)
    jax.block_until_ready(logits)
    assert logits.shape == (N, C)
    assert jnp.allclose(logits, ref_logits, atol=1e-1, rtol=5e-2), "bf16 fused mismatch"

    # Large-N code path: row-tiled parallel kernels, N padded 208 -> 256
    # (exercises the ragged-edge handling), layer-2 support fused into layer 1.
    logits_tf32 = gcn_net(adjacency, feature, w1, b1, w2, b2,
                          fuse=False, tile_n=128, use_bf16=False)
    jax.block_until_ready(logits_tf32)
    assert jnp.allclose(logits_tf32, ref_logits, atol=5e-4, rtol=5e-4), "f32 tiled mismatch"

    logits_tiled = gcn_net(adjacency, feature, w1, b1, w2, b2,
                           fuse=False, tile_n=128)
    jax.block_until_ready(logits_tiled)
    assert jnp.allclose(logits_tiled, ref_logits, atol=1e-1, rtol=5e-2), "bf16 tiled mismatch"

    print("KERNEL_OK")
</pallas_src>

<mosaic_0001>
module attributes {stable_mosaic.version = 11 : i64} {
  func.func @_gcn_fused_kernel(%arg0: i32, %arg1: memref<208x208xf32, #tpu.memory_space<vmem>>, %arg2: memref<208x128xf32, #tpu.memory_space<vmem>>, %arg3: memref<128x128xf32, #tpu.memory_space<vmem>>, %arg4: memref<1x128xf32, #tpu.memory_space<vmem>>, %arg5: memref<128x128xf32, #tpu.memory_space<vmem>>, %arg6: memref<1x128xf32, #tpu.memory_space<vmem>>, %arg7: memref<208x128xf32, #tpu.memory_space<vmem>>) attributes {dimension_semantics = [#tpu.dimension_semantics<arbitrary>], iteration_bounds = array<i64: 1>, scalar_prefetch = 0 : i64, scratch_operands = 0 : i64, tpu.core_type = #tpu.core_type<tc>, window_params = [{pipeline_mode = #tpu.pipeline_mode<synchronous>, transform_indices = @transform_0, window_bounds = array<i64: 208, 208>}, {pipeline_mode = #tpu.pipeline_mode<synchronous>, transform_indices = @transform_1, window_bounds = array<i64: 208, 128>}, {pipeline_mode = #tpu.pipeline_mode<synchronous>, transform_indices = @transform_2, window_bounds = array<i64: 128, 128>}, {pipeline_mode = #tpu.pipeline_mode<synchronous>, transform_indices = @transform_3, window_bounds = array<i64: 1, 128>}, {pipeline_mode = #tpu.pipeline_mode<synchronous>, transform_indices = @transform_4, window_bounds = array<i64: 128, 128>}, {pipeline_mode = #tpu.pipeline_mode<synchronous>, transform_indices = @transform_5, window_bounds = array<i64: 1, 128>}, {pipeline_mode = #tpu.pipeline_mode<synchronous>, transform_indices = @transform_6, window_bounds = array<i64: 208, 128>}]} {
    %c0 = arith.constant 0 : index
    %c0_0 = arith.constant 0 : index
    %0 = vector.load %arg2[%c0, %c0_0] : memref<208x128xf32, #tpu.memory_space<vmem>>, vector<208x128xf32>
    %c0_1 = arith.constant 0 : index
    %c0_2 = arith.constant 0 : index
    %1 = vector.load %arg3[%c0_1, %c0_2] : memref<128x128xf32, #tpu.memory_space<vmem>>, vector<128x128xf32>
    %cst = arith.constant dense<0.000000e+00> : vector<208x128xf32>
    %2 = tpu.matmul %0, %1, %cst {dimension_numbers = #tpu.dot_dimension_numbers<[1], [0], [0], [1], [0, 0, 1, 1], [], []>} : vector<208x128xf32>, vector<128x128xf32>, vector<208x128xf32> -> vector<208x128xf32>
    %c0_3 = arith.constant 0 : index
    %c0_4 = arith.constant 0 : index
    %3 = vector.load %arg1[%c0_3, %c0_4] : memref<208x208xf32, #tpu.memory_space<vmem>>, vector<208x208xf32>
    %cst_5 = arith.constant dense<0.000000e+00> : vector<208x128xf32>
    %4 = tpu.matmul %3, %2, %cst_5 {dimension_numbers = #tpu.dot_dimension_numbers<[1], [0], [0], [1], [0, 0, 1, 1], [], []>} : vector<208x208xf32>, vector<208x128xf32>, vector<208x128xf32> -> vector<208x128xf32>
    %c0_6 = arith.constant 0 : index
    %c0_7 = arith.constant 0 : index
    %5 = vector.load %arg4[%c0_6, %c0_7] : memref<1x128xf32, #tpu.memory_space<vmem>>, vector<1x128xf32>
    %6 = vector.broadcast %5 : vector<1x128xf32> to vector<208x128xf32>
    %7 = arith.addf %4, %6 : vector<208x128xf32>
    %cst_8 = arith.constant 0.000000e+00 : f32
    %8 = vector.broadcast %cst_8 : f32 to vector<208x128xf32>
    %9 = arith.maximumf %7, %8 : vector<208x128xf32>
    %c0_9 = arith.constant 0 : index
    %c0_10 = arith.constant 0 : index
    %10 = vector.load %arg5[%c0_9, %c0_10] : memref<128x128xf32, #tpu.memory_space<vmem>>, vector<128x128xf32>
    %cst_11 = arith.constant dense<0.000000e+00> : vector<208x128xf32>
    %11 = tpu.matmul %9, %10, %cst_11 {dimension_numbers = #tpu.dot_dimension_numbers<[1], [0], [0], [1], [0, 0, 1, 1], [], []>} : vector<208x128xf32>, vector<128x128xf32>, vector<208x128xf32> -> vector<208x128xf32>
    %c0_12 = arith.constant 0 : index
    %c0_13 = arith.constant 0 : index
    %12 = vector.load %arg1[%c0_12, %c0_13] : memref<208x208xf32, #tpu.memory_space<vmem>>, vector<208x208xf32>
    %cst_14 = arith.constant dense<0.000000e+00> : vector<208x128xf32>
    %13 = tpu.matmul %12, %11, %cst_14 {dimension_numbers = #tpu.dot_dimension_numbers<[1], [0], [0], [1], [0, 0, 1, 1], [], []>} : vector<208x208xf32>, vector<208x128xf32>, vector<208x128xf32> -> vector<208x128xf32>
    %c0_15 = arith.constant 0 : index
    %c0_16 = arith.constant 0 : index
    %14 = vector.load %arg6[%c0_15, %c0_16] : memref<1x128xf32, #tpu.memory_space<vmem>>, vector<1x128xf32>
    %15 = vector.broadcast %14 : vector<1x128xf32> to vector<208x128xf32>
    %16 = arith.addf %13, %15 : vector<208x128xf32>
    %c0_17 = arith.constant 0 : index
    %c0_18 = arith.constant 0 : index
    %17 = vector.load %arg7[%c0_17, %c0_18] : memref<208x128xf32, #tpu.memory_space<vmem>>, vector<208x128xf32>
    tpu.vector_store %arg7[%c0_17, %c0_18], %16 {strides = array<i32>} : memref<208x128xf32, #tpu.memory_space<vmem>>, vector<208x128xf32>,
    return
  }
  func.func @transform_0(%arg0: i32) -> (i32, i32) {
    %c0_i32 = arith.constant 0 : i32
    %c0_i32_0 = arith.constant 0 : i32
    %c0_i32_1 = arith.constant 0 : i32
    return %c0_i32, %c0_i32_0 : i32, i32
  }
  func.func @transform_1(%arg0: i32) -> (i32, i32) {
    %c0_i32 = arith.constant 0 : i32
    %c0_i32_0 = arith.constant 0 : i32
    %c0_i32_1 = arith.constant 0 : i32
    return %c0_i32, %c0_i32_0 : i32, i32
  }
  func.func @transform_2(%arg0: i32) -> (i32, i32) {
    %c0_i32 = arith.constant 0 : i32
    %c0_i32_0 = arith.constant 0 : i32
    %c0_i32_1 = arith.constant 0 : i32
    return %c0_i32, %c0_i32_0 : i32, i32
  }
  func.func @transform_3(%arg0: i32) -> (i32, i32) {
    %c0_i32 = arith.constant 0 : i32
    %c0_i32_0 = arith.constant 0 : i32
    %c0_i32_1 = arith.constant 0 : i32
    return %c0_i32, %c0_i32_0 : i32, i32
  }
  func.func @transform_4(%arg0: i32) -> (i32, i32) {
    %c0_i32 = arith.constant 0 : i32
    %c0_i32_0 = arith.constant 0 : i32
    %c0_i32_1 = arith.constant 0 : i32
    return %c0_i32, %c0_i32_0 : i32, i32
  }
  func.func @transform_5(%arg0: i32) -> (i32, i32) {
    %c0_i32 = arith.constant 0 : i32
    %c0_i32_0 = arith.constant 0 : i32
    %c0_i32_1 = arith.constant 0 : i32
    return %c0_i32, %c0_i32_0 : i32, i32
  }
  func.func @transform_6(%arg0: i32) -> (i32, i32) {
    %c0_i32 = arith.constant 0 : i32
    %c0_i32_0 = arith.constant 0 : i32
    %c0_i32_1 = arith.constant 0 : i32
    return %c0_i32, %c0_i32_0 : i32, i32
  }
}

</mosaic_0001>

<llo_original>
// kernel: tpu_custom_call.1
$region0: #{tpu_custom_call.1}
  #allocation0 [shape = 'u32[]', space=smem, size = 0x4, offset = 0x4, fixed_abs, tag = 'smem constant byte address 0x4 - core index']
  #allocation1 [shape = 'u32[72,128]{1,0:T(1,128)}', space=vmem, size = 0x9000, scoped, tag = 'internal scratch']
  %s0 = inlined_call_operand.hbm [shape: f32[208,208], index: 0, kind: input, shape index: {}]
  %s1 = inlined_call_operand.hbm [shape: f32[208,128], index: 1, kind: input, shape index: {}]
  %s2 = inlined_call_operand.hbm [shape: f32[128,128], index: 2, kind: input, shape index: {}]
  %s3 = inlined_call_operand.vmem [shape: f32[1,128], index: 3, kind: input, shape index: {}]
  %s4 = inlined_call_operand.hbm [shape: f32[128,128], index: 4, kind: input, shape index: {}]
  %s5 = inlined_call_operand.vmem [shape: f32[1,128], index: 5, kind: input, shape index: {}]
  %s6 = inlined_call_operand.hbm [shape: f32[208,128], index: 6, kind: output, shape index: {}]
  %s7 = sld [smem:[#allocation0]]
  $region50: #{tpu_custom_call.1} parent=0
    _
  %s9 = ssub.s32 1, %s7
  %s10 = scalar_select 0, %s9, %s7
  $region1: #{tpu_custom_call.1} parent=0
    #allocation2 [shape = 'u8[212992]{0}', space=vmem, size = 0x34000, scoped, tag = 'input window, operand 0, single buffered']
    #allocation3 [shape = 's32[1]{0}', space=sflag, size = 0x4, scoped, tag = 'scoped memory for tpu_custom_call.1']
    #allocation4 [shape = 's32[1]{0}', space=sflag, size = 0x4, scoped, tag = 'scoped memory for tpu_custom_call.1']
    #allocation5 [shape = 'u8[106496]{0}', space=vmem, size = 0x1a000, scoped, tag = 'input window, operand 1, single buffered']
    #allocation6 [shape = 's32[1]{0}', space=sflag, size = 0x4, scoped, tag = 'scoped memory for tpu_custom_call.1']
    #allocation7 [shape = 'u8[65536]{0}', space=vmem, size = 0x10000, scoped, tag = 'input window, operand 2, single buffered']
    #allocation8 [shape = 'u8[65536]{0}', space=vmem, size = 0x10000, scoped, tag = 'input window, operand 4, single buffered']
    #allocation9 [shape = 's32[1]{0}', space=sflag, size = 0x4, scoped, tag = 'scoped memory for tpu_custom_call.1']
    #allocation10 [shape = 'u8[106496]{0}', space=vmem, size = 0x1a000, scoped, tag = 'output window, operand 0, single buffered']
    %11 = vsyncpa [#allocation3], 0
    %12 = vsyncpa [#allocation6], 0
    %13 = vsyncpa [#allocation9], 0
    %14 = vsyncpa [#allocation4], 0
    // Predicated region
    $region2: #{tpu_custom_call.1} parent=1 // pred_check
      _
    $region3: #{tpu_custom_call.1} parent=1 // pred_check_branch
      %16 = sbr.rel (0) target = $region5
    $region4: #{tpu_custom_call.1} parent=1 // pred_region
      %18 = vsyncadd [#allocation3], 0
      %s19 = sshll.u32 %s0, 4
      %s20 = int_to_ptr.hbm [resolvable:$true] %s19
      %s21 = sshll.u32 [#allocation2], 4
      %s22 = int_to_ptr.vmem [resolvable:$true] %s21
      %27 = dma.hbm_to_vmem [thread:$0]  %s20, 6656, %s22, [#allocation3], 256, 256, 16
    $region5: #{tpu_custom_call.1} parent=1 // pred_fallthru
      _
    // Predicated region
    $region6: #{tpu_custom_call.1} parent=1 // pred_check
      _
    $region7: #{tpu_custom_call.1} parent=1 // pred_check_branch
      %29 = sbr.rel (0) target = $region9
    $region8: #{tpu_custom_call.1} parent=1 // pred_region
      %31 = vsyncadd [#allocation6], 0
      %s32 = sshll.u32 %s1, 4
      %s33 = int_to_ptr.hbm [resolvable:$true] %s32
      %s34 = sshll.u32 [#allocation5], 4
      %s35 = int_to_ptr.vmem [resolvable:$true] %s34
      %40 = dma.hbm_to_vmem [thread:$0]  %s33, 3328, %s35, [#allocation6], 128, 128, 8
    $region9: #{tpu_custom_call.1} parent=1 // pred_fallthru
      _
    // Predicated region
    $region10: #{tpu_custom_call.1} parent=1 // pred_check
      _
    $region11: #{tpu_custom_call.1} parent=1 // pred_check_branch
      %42 = sbr.rel (0) target = $region13
    $region12: #{tpu_custom_call.1} parent=1 // pred_region
      %44 = vsyncadd [#allocation6], 0
      %s45 = sshll.u32 %s2, 4
      %s46 = int_to_ptr.hbm [resolvable:$true] %s45
      %s47 = sshll.u32 [#allocation7], 4
      %s48 = int_to_ptr.vmem [resolvable:$true] %s47
      %53 = dma.hbm_to_vmem [thread:$0]  %s46, 2048, %s48, [#allocation6], 128, 128, 8
    $region13: #{tpu_custom_call.1} parent=1 // pred_fallthru
      _
    // Predicated region
    $region14: #{tpu_custom_call.1} parent=1 // pred_check
      _
    $region15: #{tpu_custom_call.1} parent=1 // pred_check_branch
      %55 = sbr.rel (0) target = $region17
    $region16: #{tpu_custom_call.1} parent=1 // pred_region
      _
    $region17: #{tpu_custom_call.1} parent=1 // pred_fallthru
      _
    // Predicated region
    $region18: #{tpu_custom_call.1} parent=1 // pred_check
      _
    $region19: #{tpu_custom_call.1} parent=1 // pred_check_branch
      %57 = sbr.rel (0) target = $region21
    $region20: #{tpu_custom_call.1} parent=1 // pred_region
      %59 = vsyncadd [#allocation9], 0
      %s60 = sshll.u32 %s4, 4
      %s61 = int_to_ptr.hbm [resolvable:$true] %s60
      %s62 = sshll.u32 [#allocation8], 4
      %s63 = int_to_ptr.vmem [resolvable:$true] %s62
      %68 = dma.hbm_to_vmem [thread:$0]  %s61, 2048, %s63, [#allocation9], 128, 128, 8
    $region21: #{tpu_custom_call.1} parent=1 // pred_fallthru
      _
    // Predicated region
    $region22: #{tpu_custom_call.1} parent=1 // pred_check
      _
    $region23: #{tpu_custom_call.1} parent=1 // pred_check_branch
      %70 = sbr.rel (0) target = $region25
    $region24: #{tpu_custom_call.1} parent=1 // pred_region
      _
    $region25: #{tpu_custom_call.1} parent=1 // pred_fallthru
      _
    // Predicated region
    $region26: #{tpu_custom_call.1} parent=1 // pred_check
      _
    $region27: #{tpu_custom_call.1} parent=1 // pred_check_branch
      %72 = sbr.rel (0) target = $region29
    $region28: #{tpu_custom_call.1} parent=1 // pred_region
      %74 = dma.done [#allocation3], 6656
    $region29: #{tpu_custom_call.1} parent=1 // pred_fallthru
      _
    // Predicated region
    $region30: #{tpu_custom_call.1} parent=1 // pred_check
      _
    $region31: #{tpu_custom_call.1} parent=1 // pred_check_branch
      %76 = sbr.rel (0) target = $region33
    $region32: #{tpu_custom_call.1} parent=1 // pred_region
      %78 = dma.done [#allocation6], 3328
    $region33: #{tpu_custom_call.1} parent=1 // pred_fallthru
      _
    // Predicated region
    $region34: #{tpu_custom_call.1} parent=1 // pred_check
      _
    $region35: #{tpu_custom_call.1} parent=1 // pred_check_branch
      %80 = sbr.rel (0) target = $region37
    $region36: #{tpu_custom_call.1} parent=1 // pred_region
      %82 = dma.done [#allocation6], 2048
    $region37: #{tpu_custom_call.1} parent=1 // pred_fallthru
      _
    // Predicated region
    $region38: #{tpu_custom_call.1} parent=1 // pred_check
      _
    $region39: #{tpu_custom_call.1} parent=1 // pred_check_branch
      %84 = sbr.rel (0) target = $region41
    $region40: #{tpu_custom_call.1} parent=1 // pred_region
      %86 = dma.done [#allocation9], 2048
    $region41: #{tpu_custom_call.1} parent=1 // pred_fallthru
      _
    %v87 = vld [vmem:[#allocation5] sm:$0xff]
    %v88 = vld [vmem:[#allocation5 + $0x8] sm:$0xff]
    %v89 = vld [vmem:[#allocation5 + $0x10] sm:$0xff]
    %v90 = vld [vmem:[#allocation5 + $0x18] sm:$0xff]
    %v91 = vld [vmem:[#allocation5 + $0x20] sm:$0xff]
    %v92 = vld [vmem:[#allocation5 + $0x28] sm:$0xff]
    %v93 = vld [vmem:[#allocation5 + $0x30] sm:$0xff]
    %v94 = vld [vmem:[#allocation5 + $0x38] sm:$0xff]
    %v95 = vld [vmem:[#allocation5 + $0x40] sm:$0xff]
    %v96 = vld [vmem:[#allocation5 + $0x48] sm:$0xff]
    %v97 = vld [vmem:[#allocation5 + $0x50] sm:$0xff]
    %v98 = vld [vmem:[#allocation5 + $0x58] sm:$0xff]
    %v99 = vld [vmem:[#allocation5 + $0x60] sm:$0xff]
    %v100 = vld [vmem:[#allocation5 + $0x68] sm:$0xff]
    %v101 = vld [vmem:[#allocation5 + $0x70] sm:$0xff]
    %v102 = vld [vmem:[#allocation5 + $0x78] sm:$0xff]
    %v103 = vld [vmem:[#allocation5 + $0x80] sm:$0xff]
    %v104 = vld [vmem:[#allocation5 + $0x88] sm:$0xff]
    %v105 = vld [vmem:[#allocation5 + $0x90] sm:$0xff]
    %v106 = vld [vmem:[#allocation5 + $0x98] sm:$0xff]
    %v107 = vld [vmem:[#allocation5 + $0xa0] sm:$0xff]
    %v108 = vld [vmem:[#allocation5 + $0xa8] sm:$0xff]
    %v109 = vld [vmem:[#allocation5 + $0xb0] sm:$0xff]
    %v110 = vld [vmem:[#allocation5 + $0xb8] sm:$0xff]
    %v111 = vld [vmem:[#allocation5 + $0xc0] sm:$0xff]
    %v112 = vld [vmem:[#allocation5 + $0xc8] sm:$0xff]
    %v113 = vld [vmem:[#allocation7] sm:$0xff]
    %v114 = vld [vmem:[#allocation7 + $0x8] sm:$0xff]
    %v115 = vld [vmem:[#allocation7 + $0x10] sm:$0xff]
    %v116 = vld [vmem:[#allocation7 + $0x18] sm:$0xff]
    %v117 = vld [vmem:[#allocation7 + $0x20] sm:$0xff]
    %v118 = vld [vmem:[#allocation7 + $0x28] sm:$0xff]
    %v119 = vld [vmem:[#allocation7 + $0x30] sm:$0xff]
    %v120 = vld [vmem:[#allocation7 + $0x38] sm:$0xff]
    %v121 = vld [vmem:[#allocation7 + $0x40] sm:$0xff]
    %v122 = vld [vmem:[#allocation7 + $0x48] sm:$0xff]
    %v123 = vld [vmem:[#allocation7 + $0x50] sm:$0xff]
    %v124 = vld [vmem:[#allocation7 + $0x58] sm:$0xff]
    %v125 = vld [vmem:[#allocation7 + $0x60] sm:$0xff]
    %v126 = vld [vmem:[#allocation7 + $0x68] sm:$0xff]
    %v127 = vld [vmem:[#allocation7 + $0x70] sm:$0xff]
    %v128 = vld [vmem:[#allocation7 + $0x78] sm:$0xff]
    %129 = vmatpush.msra.mxu0 %v128
    %130 = vmatpush.msra.mxu0 %v127
    %131 = vmatpush.msra.mxu0 %v126
    %132 = vmatpush.msra.mxu0 %v125
    %133 = vmatpush.msra.mxu0 %v124
    %134 = vmatpush.msra.mxu0 %v123
    %135 = vmatpush.msra.mxu0 %v122
    %136 = vmatpush.msra.mxu0 %v121
    %137 = vmatpush.msra.mxu0 %v120
    %138 = vmatpush.msra.mxu0 %v119
    %139 = vmatpush.msra.mxu0 %v118
    %140 = vmatpush.msra.mxu0 %v117
    %141 = vmatpush.msra.mxu0 %v116
    %142 = vmatpush.msra.mxu0 %v115
    %143 = vmatpush.msra.mxu0 %v114
    %144 = vmatpush.msra.mxu0 %v113
    %145 = vmatmul.f32.gmra.mxu0 %v87
    %v146 = vpop.f32.mrf.mxu0
    %v147 = vadd.f32 0.0, %v146
    %148 = vmatmul.f32.gmra.mxu0 %v88
    %v149 = vpop.f32.mrf.mxu0
    %v150 = vadd.f32 0.0, %v149
    %151 = vmatmul.f32.gmra.mxu0 %v89
    %v152 = vpop.f32.mrf.mxu0
    %v153 = vadd.f32 0.0, %v152
    %154 = vmatmul.f32.gmra.mxu0 %v90
    %v155 = vpop.f32.mrf.mxu0
    %v156 = vadd.f32 0.0, %v155
    %157 = vmatmul.f32.gmra.mxu0 %v91
    %v158 = vpop.f32.mrf.mxu0
    %v159 = vadd.f32 0.0, %v158
    %160 = vmatmul.f32.gmra.mxu0 %v92
    %v161 = vpop.f32.mrf.mxu0
    %v162 = vadd.f32 0.0, %v161
    %163 = vmatmul.f32.gmra.mxu0 %v93
    %v164 = vpop.f32.mrf.mxu0
    %v165 = vadd.f32 0.0, %v164
    %166 = vmatmul.f32.gmra.mxu0 %v94
    %v167 = vpop.f32.mrf.mxu0
    %v168 = vadd.f32 0.0, %v167
    %169 = vmatmul.f32.gmra.mxu0 %v95
    %v170 = vpop.f32.mrf.mxu0
    %v171 = vadd.f32 0.0, %v170
    %172 = vmatmul.f32.gmra.mxu0 %v96
    %v173 = vpop.f32.mrf.mxu0
    %v174 = vadd.f32 0.0, %v173
    %175 = vmatmul.f32.gmra.mxu0 %v97
    %v176 = vpop.f32.mrf.mxu0
    %v177 = vadd.f32 0.0, %v176
    %178 = vmatmul.f32.gmra.mxu0 %v98
    %v179 = vpop.f32.mrf.mxu0
    %v180 = vadd.f32 0.0, %v179
    %181 = vmatmul.f32.gmra.mxu0 %v99
    %v182 = vpop.f32.mrf.mxu0
    %v183 = vadd.f32 0.0, %v182
    %184 = vmatmul.f32.gmra.mxu0 %v100
    %v185 = vpop.f32.mrf.mxu0
    %v186 = vadd.f32 0.0, %v185
    %187 = vmatmul.f32.gmra.mxu0 %v101
    %v188 = vpop.f32.mrf.mxu0
    %v189 = vadd.f32 0.0, %v188
    %190 = vmatmul.f32.gmra.mxu0 %v102
    %v191 = vpop.f32.mrf.mxu0
    %v192 = vadd.f32 0.0, %v191
    %193 = vmatmul.f32.gmra.mxu0 %v103
    %v194 = vpop.f32.mrf.mxu0
    %v195 = vadd.f32 0.0, %v194
    %196 = vmatmul.f32.gmra.mxu0 %v104
    %v197 = vpop.f32.mrf.mxu0
    %v198 = vadd.f32 0.0, %v197
    %199 = vmatmul.f32.gmra.mxu0 %v105
    %v200 = vpop.f32.mrf.mxu0
    %v201 = vadd.f32 0.0, %v200
    %202 = vmatmul.f32.gmra.mxu0 %v106
    %v203 = vpop.f32.mrf.mxu0
    %v204 = vadd.f32 0.0, %v203
    %205 = vmatmul.f32.gmra.mxu0 %v107
    %v206 = vpop.f32.mrf.mxu0
    %v207 = vadd.f32 0.0, %v206
    %208 = vmatmul.f32.gmra.mxu0 %v108
    %v209 = vpop.f32.mrf.mxu0
    %v210 = vadd.f32 0.0, %v209
    %211 = vmatmul.f32.gmra.mxu0 %v109
    %v212 = vpop.f32.mrf.mxu0
    %v213 = vadd.f32 0.0, %v212
    %214 = vmatmul.f32.gmra.mxu0 %v110
    %v215 = vpop.f32.mrf.mxu0
    %v216 = vadd.f32 0.0, %v215
    %217 = vmatmul.f32.gmra.mxu0 %v111
    %v218 = vpop.f32.mrf.mxu0
    %v219 = vadd.f32 0.0, %v218
    %220 = vmatmul.f32.gmra.mxu0 %v112
    %v221 = vpop.f32.mrf.mxu0
    %v222 = vadd.f32 0.0, %v221
    %223 = vdwg.mxu0
    %v224 = vld [vmem:[#allocation2] sm:$0xff]
    %v225 = vld [vmem:[#allocation2 + $0x8] sm:$0xff]
    %v226 = vld [vmem:[#allocation2 + $0x10] sm:$0xff]
    %v227 = vld [vmem:[#allocation2 + $0x18] sm:$0xff]
    %v228 = vld [vmem:[#allocation2 + $0x20] sm:$0xff]
    %v229 = vld [vmem:[#allocation2 + $0x28] sm:$0xff]
    %v230 = vld [vmem:[#allocation2 + $0x30] sm:$0xff]
    %v231 = vld [vmem:[#allocation2 + $0x38] sm:$0xff]
    %v232 = vld [vmem:[#allocation2 + $0x40] sm:$0xff]
    %v233 = vld [vmem:[#allocation2 + $0x48] sm:$0xff]
    %v234 = vld [vmem:[#allocation2 + $0x50] sm:$0xff]
    %v235 = vld [vmem:[#allocation2 + $0x58] sm:$0xff]
    %v236 = vld [vmem:[#allocation2 + $0x60] sm:$0xff]
    %v237 = vld [vmem:[#allocation2 + $0x68] sm:$0xff]
    %v238 = vld [vmem:[#allocation2 + $0x70] sm:$0xff]
    %v239 = vld [vmem:[#allocation2 + $0x78] sm:$0xff]
    %v240 = vld [vmem:[#allocation2 + $0x80] sm:$0xff]
    %v241 = vld [vmem:[#allocation2 + $0x88] sm:$0xff]
    %v242 = vld [vmem:[#allocation2 + $0x90] sm:$0xff]
    %v243 = vld [vmem:[#allocation2 + $0x98] sm:$0xff]
    %v244 = vld [vmem:[#allocation2 + $0xa0] sm:$0xff]
    %v245 = vld [vmem:[#allocation2 + $0xa8] sm:$0xff]
    %v246 = vld [vmem:[#allocation2 + $0xb0] sm:$0xff]
    %v247 = vld [vmem:[#allocation2 + $0xb8] sm:$0xff]
    %v248 = vld [vmem:[#allocation2 + $0xc0] sm:$0xff]
    %v249 = vld [vmem:[#allocation2 + $0xc8] sm:$0xff]
    %v250 = vld [vmem:[#allocation2 + $0xd0] sm:$0xff]
    %v251 = vld [vmem:[#allocation2 + $0xd8] sm:$0xff]
    %v252 = vld [vmem:[#allocation2 + $0xe0] sm:$0xff]
    %v253 = vld [vmem:[#allocation2 + $0xe8] sm:$0xff]
    %v254 = vld [vmem:[#allocation2 + $0xf0] sm:$0xff]
    %v255 = vld [vmem:[#allocation2 + $0xf8] sm:$0xff]
    %v256 = vld [vmem:[#allocation2 + $0x100] sm:$0xff]
    %v257 = vld [vmem:[#allocation2 + $0x108] sm:$0xff]
    %v258 = vld [vmem:[#allocation2 + $0x110] sm:$0xff]
    %v259 = vld [vmem:[#allocation2 + $0x118] sm:$0xff]
    %v260 = vld [vmem:[#allocation2 + $0x120] sm:$0xff]
    %v261 = vld [vmem:[#allocation2 + $0x128] sm:$0xff]
    %v262 = vld [vmem:[#allocation2 + $0x130] sm:$0xff]
    %v263 = vld [vmem:[#allocation2 + $0x138] sm:$0xff]
    %v264 = vld [vmem:[#allocation2 + $0x140] sm:$0xff]
    %v265 = vld [vmem:[#allocation2 + $0x148] sm:$0xff]
    %v266 = vld [vmem:[#allocation2 + $0x150] sm:$0xff]
    %v267 = vld [vmem:[#allocation2 + $0x158] sm:$0xff]
    %v268 = vld [vmem:[#allocation2 + $0x160] sm:$0xff]
    %v269 = vld [vmem:[#allocation2 + $0x168] sm:$0xff]
    %v270 = vld [vmem:[#allocation2 + $0x170] sm:$0xff]
    %v271 = vld [vmem:[#allocation2 + $0x178] sm:$0xff]
    %v272 = vld [vmem:[#allocation2 + $0x180] sm:$0xff]
    %v273 = vld [vmem:[#allocation2 + $0x188] sm:$0xff]
    %v274 = vld [vmem:[#allocation2 + $0x190] sm:$0xff]
    %v275 = vld [vmem:[#allocation2 + $0x198] sm:$0xff]
    %v276 = vld [vmem:[%s3] sm:$0x1]
    %v278 = vperm.slane %v276, 0
    %vm280 = vcmask 654336
    %v282 = vsel %vm280, %v225, 0
    %v285 = vsel %vm280, %v227, 0
    %v288 = vsel %vm280, %v229, 0
    %v291 = vsel %vm280, %v231, 0
    %v294 = vsel %vm280, %v233, 0
    %v297 = vsel %vm280, %v235, 0
    %v300 = vsel %vm280, %v237, 0
    %v303 = vsel %vm280, %v239, 0
    %v306 = vsel %vm280, %v241, 0
    %v309 = vsel %vm280, %v243, 0
    %v312 = vsel %vm280, %v245, 0
    %v315 = vsel %vm280, %v247, 0
    %v318 = vsel %vm280, %v249, 0
    %v321 = vsel %vm280, %v251, 0
    %v324 = vsel %vm280, %v253, 0
    %v327 = vsel %vm280, %v255, 0
    %v330 = vsel %vm280, %v257, 0
    %v333 = vsel %vm280, %v259, 0
    %v336 = vsel %vm280, %v261, 0
    %v339 = vsel %vm280, %v263, 0
    %v342 = vsel %vm280, %v265, 0
    %v345 = vsel %vm280, %v267, 0
    %v348 = vsel %vm280, %v269, 0
    %v351 = vsel %vm280, %v271, 0
    %v354 = vsel %vm280, %v273, 0
    %v357 = vsel %vm280, %v275, 0
    %359 = vmatpush.msra.mxu0 %v192
    %360 = vmatpush.msra.mxu0 %v189
    %361 = vmatpush.msra.mxu0 %v186
    %362 = vmatpush.msra.mxu0 %v183
    %363 = vmatpush.msra.mxu0 %v180
    %364 = vmatpush.msra.mxu0 %v177
    %365 = vmatpush.msra.mxu0 %v174
    %366 = vmatpush.msra.mxu0 %v171
    %367 = vmatpush.msra.mxu0 %v168
    %368 = vmatpush.msra.mxu0 %v165
    %369 = vmatpush.msra.mxu0 %v162
    %370 = vmatpush.msra.mxu0 %v159
    %371 = vmatpush.msra.mxu0 %v156
    %372 = vmatpush.msra.mxu0 %v153
    %373 = vmatpush.msra.mxu0 %v150
    %374 = vmatpush.msra.mxu0 %v147
    %375 = vmatmul.f32.gmra.mxu0 %v224
    %v376 = vpop.f32.mrf.mxu0
    %v377 = vadd.f32 %v278, %v376
    %378 = vmatmul.f32.gmra.mxu0 %v226
    %v379 = vpop.f32.mrf.mxu0
    %v380 = vadd.f32 %v278, %v379
    %381 = vmatmul.f32.gmra.mxu0 %v228
    %v382 = vpop.f32.mrf.mxu0
    %v383 = vadd.f32 %v278, %v382
    %384 = vmatmul.f32.gmra.mxu0 %v230
    %v385 = vpop.f32.mrf.mxu0
    %v386 = vadd.f32 %v278, %v385
    %387 = vmatmul.f32.gmra.mxu0 %v232
    %v388 = vpop.f32.mrf.mxu0
    %v389 = vadd.f32 %v278, %v388
    %390 = vmatmul.f32.gmra.mxu0 %v234
    %v391 = vpop.f32.mrf.mxu0
    %v392 = vadd.f32 %v278, %v391
    %393 = vmatmul.f32.gmra.mxu0 %v236
    %v394 = vpop.f32.mrf.mxu0
    %v395 = vadd.f32 %v278, %v394
    %396 = vmatmul.f32.gmra.mxu0 %v238
    %v397 = vpop.f32.mrf.mxu0
    %v398 = vadd.f32 %v278, %v397
    %399 = vmatmul.f32.gmra.mxu0 %v240
    %v400 = vpop.f32.mrf.mxu0
    %v401 = vadd.f32 %v278, %v400
    %402 = vmatmul.f32.gmra.mxu0 %v242
    %v403 = vpop.f32.mrf.mxu0
    %v404 = vadd.f32 %v278, %v403
    %405 = vmatmul.f32.gmra.mxu0 %v244
    %v406 = vpop.f32.mrf.mxu0
    %v407 = vadd.f32 %v278, %v406
    %408 = vmatmul.f32.gmra.mxu0 %v246
    %v409 = vpop.f32.mrf.mxu0
    %v410 = vadd.f32 %v278, %v409
    %411 = vmatmul.f32.gmra.mxu0 %v248
    %v412 = vpop.f32.mrf.mxu0
    %v413 = vadd.f32 %v278, %v412
    %414 = vmatmul.f32.gmra.mxu0 %v250
    %v415 = vpop.f32.mrf.mxu0
    %v416 = vadd.f32 %v278, %v415
    %417 = vmatmul.f32.gmra.mxu0 %v252
    %v418 = vpop.f32.mrf.mxu0
    %v419 = vadd.f32 %v278, %v418
    %420 = vmatmul.f32.gmra.mxu0 %v254
    %v421 = vpop.f32.mrf.mxu0
    %v422 = vadd.f32 %v278, %v421
    %423 = vmatmul.f32.gmra.mxu0 %v256
    %v424 = vpop.f32.mrf.mxu0
    %v425 = vadd.f32 %v278, %v424
    %426 = vmatmul.f32.gmra.mxu0 %v258
    %v427 = vpop.f32.mrf.mxu0
    %v428 = vadd.f32 %v278, %v427
    %429 = vmatmul.f32.gmra.mxu0 %v260
    %v430 = vpop.f32.mrf.mxu0
    %v431 = vadd.f32 %v278, %v430
    %432 = vmatmul.f32.gmra.mxu0 %v262
    %v433 = vpop.f32.mrf.mxu0
    %v434 = vadd.f32 %v278, %v433
    %435 = vmatmul.f32.gmra.mxu0 %v264
    %v436 = vpop.f32.mrf.mxu0
    %v437 = vadd.f32 %v278, %v436
    %438 = vmatmul.f32.gmra.mxu0 %v266
    %v439 = vpop.f32.mrf.mxu0
    %v440 = vadd.f32 %v278, %v439
    %441 = vmatmul.f32.gmra.mxu0 %v268
    %v442 = vpop.f32.mrf.mxu0
    %v443 = vadd.f32 %v278, %v442
    %444 = vmatmul.f32.gmra.mxu0 %v270
    %v445 = vpop.f32.mrf.mxu0
    %v446 = vadd.f32 %v278, %v445
    %447 = vmatmul.f32.gmra.mxu0 %v272
    %v448 = vpop.f32.mrf.mxu0
    %v449 = vadd.f32 %v278, %v448
    %450 = vmatmul.f32.gmra.mxu0 %v274
    %v451 = vpop.f32.mrf.mxu0
    %v452 = vadd.f32 %v278, %v451
    %453 = vdwg.mxu0
    %454 = vmatpush.msra.mxu0 0.0
    %455 = vmatpush.msra.mxu0 0.0
    %456 = vmatpush.msra.mxu0 0.0
    %457 = vmatpush.msra.mxu0 0.0
    %458 = vmatpush.msra.mxu0 0.0
    %459 = vmatpush.msra.mxu0 0.0
    %460 = vmatpush.msra.mxu0 %v222
    %461 = vmatpush.msra.mxu0 %v219
    %462 = vmatpush.msra.mxu0 %v216
    %463 = vmatpush.msra.mxu0 %v213
    %464 = vmatpush.msra.mxu0 %v210
    %465 = vmatpush.msra.mxu0 %v207
    %466 = vmatpush.msra.mxu0 %v204
    %467 = vmatpush.msra.mxu0 %v201
    %468 = vmatpush.msra.mxu0 %v198
    %469 = vmatpush.msra.mxu0 %v195
    %470 = vmatmul.f32.gmra.mxu0 %v282
    %v471 = vpop.f32.mrf.mxu0
    %v472 = vadd.f32 %v377, %v471
    %473 = vmatmul.f32.gmra.mxu0 %v285
    %v474 = vpop.f32.mrf.mxu0
    %v475 = vadd.f32 %v380, %v474
    %476 = vmatmul.f32.gmra.mxu0 %v288
    %v477 = vpop.f32.mrf.mxu0
    %v478 = vadd.f32 %v383, %v477
    %479 = vmatmul.f32.gmra.mxu0 %v291
    %v480 = vpop.f32.mrf.mxu0
    %v481 = vadd.f32 %v386, %v480
    %482 = vmatmul.f32.gmra.mxu0 %v294
    %v483 = vpop.f32.mrf.mxu0
    %v484 = vadd.f32 %v389, %v483
    %485 = vmatmul.f32.gmra.mxu0 %v297
    %v486 = vpop.f32.mrf.mxu0
    %v487 = vadd.f32 %v392, %v486
    %488 = vmatmul.f32.gmra.mxu0 %v300
    %v489 = vpop.f32.mrf.mxu0
    %v490 = vadd.f32 %v395, %v489
    %491 = vmatmul.f32.gmra.mxu0 %v303
    %v492 = vpop.f32.mrf.mxu0
    %v493 = vadd.f32 %v398, %v492
    %494 = vmatmul.f32.gmra.mxu0 %v306
    %v495 = vpop.f32.mrf.mxu0
    %v496 = vadd.f32 %v401, %v495
    %497 = vmatmul.f32.gmra.mxu0 %v309
    %v498 = vpop.f32.mrf.mxu0
    %v499 = vadd.f32 %v404, %v498
    %500 = vmatmul.f32.gmra.mxu0 %v312
    %v501 = vpop.f32.mrf.mxu0
    %v502 = vadd.f32 %v407, %v501
    %503 = vmatmul.f32.gmra.mxu0 %v315
    %v504 = vpop.f32.mrf.mxu0
    %v505 = vadd.f32 %v410, %v504
    %506 = vmatmul.f32.gmra.mxu0 %v318
    %v507 = vpop.f32.mrf.mxu0
    %v508 = vadd.f32 %v413, %v507
    %509 = vmatmul.f32.gmra.mxu0 %v321
    %v510 = vpop.f32.mrf.mxu0
    %v511 = vadd.f32 %v416, %v510
    %512 = vmatmul.f32.gmra.mxu0 %v324
    %v513 = vpop.f32.mrf.mxu0
    %v514 = vadd.f32 %v419, %v513
    %515 = vmatmul.f32.gmra.mxu0 %v327
    %v516 = vpop.f32.mrf.mxu0
    %v517 = vadd.f32 %v422, %v516
    %518 = vmatmul.f32.gmra.mxu0 %v330
    %v519 = vpop.f32.mrf.mxu0
    %v520 = vadd.f32 %v425, %v519
    %521 = vmatmul.f32.gmra.mxu0 %v333
    %v522 = vpop.f32.mrf.mxu0
    %v523 = vadd.f32 %v428, %v522
    %524 = vmatmul.f32.gmra.mxu0 %v336
    %v525 = vpop.f32.mrf.mxu0
    %v526 = vadd.f32 %v431, %v525
    %527 = vmatmul.f32.gmra.mxu0 %v339
    %v528 = vpop.f32.mrf.mxu0
    %v529 = vadd.f32 %v434, %v528
    %530 = vmatmul.f32.gmra.mxu0 %v342
    %v531 = vpop.f32.mrf.mxu0
    %v532 = vadd.f32 %v437, %v531
    %533 = vmatmul.f32.gmra.mxu0 %v345
    %v534 = vpop.f32.mrf.mxu0
    %v535 = vadd.f32 %v440, %v534
    %536 = vmatmul.f32.gmra.mxu0 %v348
    %v537 = vpop.f32.mrf.mxu0
    %v538 = vadd.f32 %v443, %v537
    %539 = vmatmul.f32.gmra.mxu0 %v351
    %v540 = vpop.f32.mrf.mxu0
    %v541 = vadd.f32 %v446, %v540
    %542 = vmatmul.f32.gmra.mxu0 %v354
    %v543 = vpop.f32.mrf.mxu0
    %v544 = vadd.f32 %v449, %v543
    %545 = vmatmul.f32.gmra.mxu0 %v357
    %v546 = vpop.f32.mrf.mxu0
    %v547 = vadd.f32 %v452, %v546
    %548 = vdwg.mxu0
    %v549 = vmax.f32 %v472, 0.0
    %v550 = vmax.f32 %v475, 0.0
    %v551 = vmax.f32 %v478, 0.0
    %v552 = vmax.f32 %v481, 0.0
    %v553 = vmax.f32 %v484, 0.0
    %v554 = vmax.f32 %v487, 0.0
    %v555 = vmax.f32 %v490, 0.0
    %v556 = vmax.f32 %v493, 0.0
    %v557 = vmax.f32 %v496, 0.0
    %v558 = vmax.f32 %v499, 0.0
    %v559 = vmax.f32 %v502, 0.0
    %v560 = vmax.f32 %v505, 0.0
    %v561 = vmax.f32 %v508, 0.0
    %v562 = vmax.f32 %v511, 0.0
    %v563 = vmax.f32 %v514, 0.0
    %v564 = vmax.f32 %v517, 0.0
    %v565 = vmax.f32 %v520, 0.0
    %v566 = vmax.f32 %v523, 0.0
    %v567 = vmax.f32 %v526, 0.0
    %v568 = vmax.f32 %v529, 0.0
    %v569 = vmax.f32 %v532, 0.0
    %v570 = vmax.f32 %v535, 0.0
    %v571 = vmax.f32 %v538, 0.0
    %v572 = vmax.f32 %v541, 0.0
    %v573 = vmax.f32 %v544, 0.0
    %v574 = vmax.f32 %v547, 0.0
    %v575 = vld [vmem:[#allocation8] sm:$0xff]
    %v576 = vld [vmem:[#allocation8 + $0x8] sm:$0xff]
    %v577 = vld [vmem:[#allocation8 + $0x10] sm:$0xff]
    %v578 = vld [vmem:[#allocation8 + $0x18] sm:$0xff]
    %v579 = vld [vmem:[#allocation8 + $0x20] sm:$0xff]
    %v580 = vld [vmem:[#allocation8 + $0x28] sm:$0xff]
    %v581 = vld [vmem:[#allocation8 + $0x30] sm:$0xff]
    %v582 = vld [vmem:[#allocation8 + $0x38] sm:$0xff]
    %v583 = vld [vmem:[#allocation8 + $0x40] sm:$0xff]
    %v584 = vld [vmem:[#allocation8 + $0x48] sm:$0xff]
    %v585 = vld [vmem:[#allocation8 + $0x50] sm:$0xff]
    %v586 = vld [vmem:[#allocation8 + $0x58] sm:$0xff]
    %v587 = vld [vmem:[#allocation8 + $0x60] sm:$0xff]
    %v588 = vld [vmem:[#allocation8 + $0x68] sm:$0xff]
    %v589 = vld [vmem:[#allocation8 + $0x70] sm:$0xff]
    %v590 = vld [vmem:[#allocation8 + $0x78] sm:$0xff]
    %591 = vmatpush.msra.mxu0 %v590
    %592 = vmatpush.msra.mxu0 %v589
    %593 = vmatpush.msra.mxu0 %v588
    %594 = vmatpush.msra.mxu0 %v587
    %595 = vmatpush.msra.mxu0 %v586
    %596 = vmatpush.msra.mxu0 %v585
    %597 = vmatpush.msra.mxu0 %v584
    %598 = vmatpush.msra.mxu0 %v583
    %599 = vmatpush.msra.mxu0 %v582
    %600 = vmatpush.msra.mxu0 %v581
    %601 = vmatpush.msra.mxu0 %v580
    %602 = vmatpush.msra.mxu0 %v579
    %603 = vmatpush.msra.mxu0 %v578
    %604 = vmatpush.msra.mxu0 %v577
    %605 = vmatpush.msra.mxu0 %v576
    %606 = vmatpush.msra.mxu0 %v575
    %607 = vmatmul.f32.gmra.mxu0 %v549
    %v608 = vpop.f32.mrf.mxu0
    %v609 = vadd.f32 0.0, %v608
    %610 = vmatmul.f32.gmra.mxu0 %v550
    %v611 = vpop.f32.mrf.mxu0
    %v612 = vadd.f32 0.0, %v611
    %613 = vmatmul.f32.gmra.mxu0 %v551
    %v614 = vpop.f32.mrf.mxu0
    %v615 = vadd.f32 0.0, %v614
    %616 = vmatmul.f32.gmra.mxu0 %v552
    %v617 = vpop.f32.mrf.mxu0
    %v618 = vadd.f32 0.0, %v617
    %619 = vmatmul.f32.gmra.mxu0 %v553
    %v620 = vpop.f32.mrf.mxu0
    %v621 = vadd.f32 0.0, %v620
    %622 = vmatmul.f32.gmra.mxu0 %v554
    %v623 = vpop.f32.mrf.mxu0
    %v624 = vadd.f32 0.0, %v623
    %625 = vmatmul.f32.gmra.mxu0 %v555
    %v626 = vpop.f32.mrf.mxu0
    %v627 = vadd.f32 0.0, %v626
    %628 = vmatmul.f32.gmra.mxu0 %v556
    %v629 = vpop.f32.mrf.mxu0
    %v630 = vadd.f32 0.0, %v629
    %631 = vmatmul.f32.gmra.mxu0 %v557
    %v632 = vpop.f32.mrf.mxu0
    %v633 = vadd.f32 0.0, %v632
    %634 = vmatmul.f32.gmra.mxu0 %v558
    %v635 = vpop.f32.mrf.mxu0
    %v636 = vadd.f32 0.0, %v635
    %637 = vmatmul.f32.gmra.mxu0 %v559
    %v638 = vpop.f32.mrf.mxu0
    %v639 = vadd.f32 0.0, %v638
    %640 = vmatmul.f32.gmra.mxu0 %v560
    %v641 = vpop.f32.mrf.mxu0
    %v642 = vadd.f32 0.0, %v641
    %643 = vmatmul.f32.gmra.mxu0 %v561
    %v644 = vpop.f32.mrf.mxu0
    %v645 = vadd.f32 0.0, %v644
    %646 = vmatmul.f32.gmra.mxu0 %v562
    %v647 = vpop.f32.mrf.mxu0
    %v648 = vadd.f32 0.0, %v647
    %649 = vmatmul.f32.gmra.mxu0 %v563
    %v650 = vpop.f32.mrf.mxu0
    %v651 = vadd.f32 0.0, %v650
    %652 = vmatmul.f32.gmra.mxu0 %v564
    %v653 = vpop.f32.mrf.mxu0
    %v654 = vadd.f32 0.0, %v653
    %655 = vmatmul.f32.gmra.mxu0 %v565
    %v656 = vpop.f32.mrf.mxu0
    %v657 = vadd.f32 0.0, %v656
    %658 = vmatmul.f32.gmra.mxu0 %v566
    %v659 = vpop.f32.mrf.mxu0
    %v660 = vadd.f32 0.0, %v659
    %661 = vmatmul.f32.gmra.mxu0 %v567
    %v662 = vpop.f32.mrf.mxu0
    %v663 = vadd.f32 0.0, %v662
    %664 = vmatmul.f32.gmra.mxu0 %v568
    %v665 = vpop.f32.mrf.mxu0
    %v666 = vadd.f32 0.0, %v665
    %667 = vmatmul.f32.gmra.mxu0 %v569
    %v668 = vpop.f32.mrf.mxu0
    %v669 = vadd.f32 0.0, %v668
    %670 = vmatmul.f32.gmra.mxu0 %v570
    %v671 = vpop.f32.mrf.mxu0
    %v672 = vadd.f32 0.0, %v671
    %673 = vmatmul.f32.gmra.mxu0 %v571
    %v674 = vpop.f32.mrf.mxu0
    %v675 = vadd.f32 0.0, %v674
    %676 = vmatmul.f32.gmra.mxu0 %v572
    %v677 = vpop.f32.mrf.mxu0
    %v678 = vadd.f32 0.0, %v677
    %679 = vmatmul.f32.gmra.mxu0 %v573
    %v680 = vpop.f32.mrf.mxu0
    %v681 = vadd.f32 0.0, %v680
    %682 = vmatmul.f32.gmra.mxu0 %v574
    %v683 = vpop.f32.mrf.mxu0
    %v684 = vadd.f32 0.0, %v683
    %685 = vdwg.mxu0
    %v686 = vld [vmem:[%s5] sm:$0x1]
    %v688 = vperm.slane %v686, 0
    %690 = vmatpush.msra.mxu0 %v654
    %691 = vmatpush.msra.mxu0 %v651
    %692 = vmatpush.msra.mxu0 %v648
    %693 = vmatpush.msra.mxu0 %v645
    %694 = vmatpush.msra.mxu0 %v642
    %695 = vmatpush.msra.mxu0 %v639
    %696 = vmatpush.msra.mxu0 %v636
    %697 = vmatpush.msra.mxu0 %v633
    %698 = vmatpush.msra.mxu0 %v630
    %699 = vmatpush.msra.mxu0 %v627
    %700 = vmatpush.msra.mxu0 %v624
    %701 = vmatpush.msra.mxu0 %v621
    %702 = vmatpush.msra.mxu0 %v618
    %703 = vmatpush.msra.mxu0 %v615
    %704 = vmatpush.msra.mxu0 %v612
    %705 = vmatpush.msra.mxu0 %v609
    %706 = vmatmul.f32.gmra.mxu0 %v224
    %v707 = vpop.f32.mrf.mxu0
    %v708 = vadd.f32 %v688, %v707
    %709 = vmatmul.f32.gmra.mxu0 %v226
    %v710 = vpop.f32.mrf.mxu0
    %v711 = vadd.f32 %v688, %v710
    %712 = vmatmul.f32.gmra.mxu0 %v228
    %v713 = vpop.f32.mrf.mxu0
    %v714 = vadd.f32 %v688, %v713
    %715 = vmatmul.f32.gmra.mxu0 %v230
    %v716 = vpop.f32.mrf.mxu0
    %v717 = vadd.f32 %v688, %v716
    %718 = vmatmul.f32.gmra.mxu0 %v232
    %v719 = vpop.f32.mrf.mxu0
    %v720 = vadd.f32 %v688, %v719
    %721 = vmatmul.f32.gmra.mxu0 %v234
    %v722 = vpop.f32.mrf.mxu0
    %v723 = vadd.f32 %v688, %v722
    %724 = vmatmul.f32.gmra.mxu0 %v236
    %v725 = vpop.f32.mrf.mxu0
    %v726 = vadd.f32 %v688, %v725
    %727 = vmatmul.f32.gmra.mxu0 %v238
    %v728 = vpop.f32.mrf.mxu0
    %v729 = vadd.f32 %v688, %v728
    %730 = vmatmul.f32.gmra.mxu0 %v240
    %v731 = vpop.f32.mrf.mxu0
    %v732 = vadd.f32 %v688, %v731
    %733 = vmatmul.f32.gmra.mxu0 %v242
    %v734 = vpop.f32.mrf.mxu0
    %v735 = vadd.f32 %v688, %v734
    %736 = vmatmul.f32.gmra.mxu0 %v244
    %v737 = vpop.f32.mrf.mxu0
    %v738 = vadd.f32 %v688, %v737
    %739 = vmatmul.f32.gmra.mxu0 %v246
    %v740 = vpop.f32.mrf.mxu0
    %v741 = vadd.f32 %v688, %v740
    %742 = vmatmul.f32.gmra.mxu0 %v248
    %v743 = vpop.f32.mrf.mxu0
    %v744 = vadd.f32 %v688, %v743
    %745 = vmatmul.f32.gmra.mxu0 %v250
    %v746 = vpop.f32.mrf.mxu0
    %v747 = vadd.f32 %v688, %v746
    %748 = vmatmul.f32.gmra.mxu0 %v252
    %v749 = vpop.f32.mrf.mxu0
    %v750 = vadd.f32 %v688, %v749
    %751 = vmatmul.f32.gmra.mxu0 %v254
    %v752 = vpop.f32.mrf.mxu0
    %v753 = vadd.f32 %v688, %v752
    %754 = vmatmul.f32.gmra.mxu0 %v256
    %v755 = vpop.f32.mrf.mxu0
    %v756 = vadd.f32 %v688, %v755
    %757 = vmatmul.f32.gmra.mxu0 %v258
    %v758 = vpop.f32.mrf.mxu0
    %v759 = vadd.f32 %v688, %v758
    %760 = vmatmul.f32.gmra.mxu0 %v260
    %v761 = vpop.f32.mrf.mxu0
    %v762 = vadd.f32 %v688, %v761
    %763 = vmatmul.f32.gmra.mxu0 %v262
    %v764 = vpop.f32.mrf.mxu0
    %v765 = vadd.f32 %v688, %v764
    %766 = vmatmul.f32.gmra.mxu0 %v264
    %v767 = vpop.f32.mrf.mxu0
    %v768 = vadd.f32 %v688, %v767
    %769 = vmatmul.f32.gmra.mxu0 %v266
    %v770 = vpop.f32.mrf.mxu0
    %v771 = vadd.f32 %v688, %v770
    %772 = vmatmul.f32.gmra.mxu0 %v268
    %v773 = vpop.f32.mrf.mxu0
    %v774 = vadd.f32 %v688, %v773
    %775 = vmatmul.f32.gmra.mxu0 %v270
    %v776 = vpop.f32.mrf.mxu0
    %v777 = vadd.f32 %v688, %v776
    %778 = vmatmul.f32.gmra.mxu0 %v272
    %v779 = vpop.f32.mrf.mxu0
    %v780 = vadd.f32 %v688, %v779
    %781 = vmatmul.f32.gmra.mxu0 %v274
    %v782 = vpop.f32.mrf.mxu0
    %v783 = vadd.f32 %v688, %v782
    %784 = vdwg.mxu0
    %785 = vmatpush.msra.mxu0 0.0
    %786 = vmatpush.msra.mxu0 0.0
    %787 = vmatpush.msra.mxu0 0.0
    %788 = vmatpush.msra.mxu0 0.0
    %789 = vmatpush.msra.mxu0 0.0
    %790 = vmatpush.msra.mxu0 0.0
    %791 = vmatpush.msra.mxu0 %v684
    %792 = vmatpush.msra.mxu0 %v681
    %793 = vmatpush.msra.mxu0 %v678
    %794 = vmatpush.msra.mxu0 %v675
    %795 = vmatpush.msra.mxu0 %v672
    %796 = vmatpush.msra.mxu0 %v669
    %797 = vmatpush.msra.mxu0 %v666
    %798 = vmatpush.msra.mxu0 %v663
    %799 = vmatpush.msra.mxu0 %v660
    %800 = vmatpush.msra.mxu0 %v657
    %801 = vmatmul.f32.gmra.mxu0 %v282
    %v802 = vpop.f32.mrf.mxu0
    %v803 = vadd.f32 %v708, %v802
    %804 = vmatmul.f32.gmra.mxu0 %v285
    %v805 = vpop.f32.mrf.mxu0
    %v806 = vadd.f32 %v711, %v805
    %807 = vmatmul.f32.gmra.mxu0 %v288
    %v808 = vpop.f32.mrf.mxu0
    %v809 = vadd.f32 %v714, %v808
    %810 = vmatmul.f32.gmra.mxu0 %v291
    %v811 = vpop.f32.mrf.mxu0
    %v812 = vadd.f32 %v717, %v811
    %813 = vmatmul.f32.gmra.mxu0 %v294
    %v814 = vpop.f32.mrf.mxu0
    %v815 = vadd.f32 %v720, %v814
    %816 = vmatmul.f32.gmra.mxu0 %v297
    %v817 = vpop.f32.mrf.mxu0
    %v818 = vadd.f32 %v723, %v817
    %819 = vmatmul.f32.gmra.mxu0 %v300
    %v820 = vpop.f32.mrf.mxu0
    %v821 = vadd.f32 %v726, %v820
    %822 = vmatmul.f32.gmra.mxu0 %v303
    %v823 = vpop.f32.mrf.mxu0
    %v824 = vadd.f32 %v729, %v823
    %825 = vmatmul.f32.gmra.mxu0 %v306
    %v826 = vpop.f32.mrf.mxu0
    %v827 = vadd.f32 %v732, %v826
    %828 = vmatmul.f32.gmra.mxu0 %v309
    %v829 = vpop.f32.mrf.mxu0
    %v830 = vadd.f32 %v735, %v829
    %831 = vmatmul.f32.gmra.mxu0 %v312
    %v832 = vpop.f32.mrf.mxu0
    %v833 = vadd.f32 %v738, %v832
    %834 = vmatmul.f32.gmra.mxu0 %v315
    %v835 = vpop.f32.mrf.mxu0
    %v836 = vadd.f32 %v741, %v835
    %837 = vmatmul.f32.gmra.mxu0 %v318
    %v838 = vpop.f32.mrf.mxu0
    %v839 = vadd.f32 %v744, %v838
    %840 = vmatmul.f32.gmra.mxu0 %v321
    %v841 = vpop.f32.mrf.mxu0
    %v842 = vadd.f32 %v747, %v841
    %843 = vmatmul.f32.gmra.mxu0 %v324
    %v844 = vpop.f32.mrf.mxu0
    %v845 = vadd.f32 %v750, %v844
    %846 = vmatmul.f32.gmra.mxu0 %v327
    %v847 = vpop.f32.mrf.mxu0
    %v848 = vadd.f32 %v753, %v847
    %849 = vmatmul.f32.gmra.mxu0 %v330
    %v850 = vpop.f32.mrf.mxu0
    %v851 = vadd.f32 %v756, %v850
    %852 = vmatmul.f32.gmra.mxu0 %v333
    %v853 = vpop.f32.mrf.mxu0
    %v854 = vadd.f32 %v759, %v853
    %855 = vmatmul.f32.gmra.mxu0 %v336
    %v856 = vpop.f32.mrf.mxu0
    %v857 = vadd.f32 %v762, %v856
    %858 = vmatmul.f32.gmra.mxu0 %v339
    %v859 = vpop.f32.mrf.mxu0
    %v860 = vadd.f32 %v765, %v859
    %861 = vmatmul.f32.gmra.mxu0 %v342
    %v862 = vpop.f32.mrf.mxu0
    %v863 = vadd.f32 %v768, %v862
    %864 = vmatmul.f32.gmra.mxu0 %v345
    %v865 = vpop.f32.mrf.mxu0
    %v866 = vadd.f32 %v771, %v865
    %867 = vmatmul.f32.gmra.mxu0 %v348
    %v868 = vpop.f32.mrf.mxu0
    %v869 = vadd.f32 %v774, %v868
    %870 = vmatmul.f32.gmra.mxu0 %v351
    %v871 = vpop.f32.mrf.mxu0
    %v872 = vadd.f32 %v777, %v871
    %873 = vmatmul.f32.gmra.mxu0 %v354
    %v874 = vpop.f32.mrf.mxu0
    %v875 = vadd.f32 %v780, %v874
    %876 = vmatmul.f32.gmra.mxu0 %v357
    %v877 = vpop.f32.mrf.mxu0
    %v878 = vadd.f32 %v783, %v877
    %879 = vdwg.mxu0
    %880 = vst [vmem:[#allocation10] sm:$0xff] %v803
    %881 = vst [vmem:[#allocation10 + $0x8] sm:$0xff] %v806
    %882 = vst [vmem:[#allocation10 + $0x10] sm:$0xff] %v809
    %883 = vst [vmem:[#allocation10 + $0x18] sm:$0xff] %v812
    %884 = vst [vmem:[#allocation10 + $0x20] sm:$0xff] %v815
    %885 = vst [vmem:[#allocation10 + $0x28] sm:$0xff] %v818
    %886 = vst [vmem:[#allocation10 + $0x30] sm:$0xff] %v821
    %887 = vst [vmem:[#allocation10 + $0x38] sm:$0xff] %v824
    %888 = vst [vmem:[#allocation10 + $0x40] sm:$0xff] %v827
    %889 = vst [vmem:[#allocation10 + $0x48] sm:$0xff] %v830
    %890 = vst [vmem:[#allocation10 + $0x50] sm:$0xff] %v833
    %891 = vst [vmem:[#allocation10 + $0x58] sm:$0xff] %v836
    %892 = vst [vmem:[#allocation10 + $0x60] sm:$0xff] %v839
    %893 = vst [vmem:[#allocation10 + $0x68] sm:$0xff] %v842
    %894 = vst [vmem:[#allocation10 + $0x70] sm:$0xff] %v845
    %895 = vst [vmem:[#allocation10 + $0x78] sm:$0xff] %v848
    %896 = vst [vmem:[#allocation10 + $0x80] sm:$0xff] %v851
    %897 = vst [vmem:[#allocation10 + $0x88] sm:$0xff] %v854
    %898 = vst [vmem:[#allocation10 + $0x90] sm:$0xff] %v857
    %899 = vst [vmem:[#allocation10 + $0x98] sm:$0xff] %v860
    %900 = vst [vmem:[#allocation10 + $0xa0] sm:$0xff] %v863
    %901 = vst [vmem:[#allocation10 + $0xa8] sm:$0xff] %v866
    %902 = vst [vmem:[#allocation10 + $0xb0] sm:$0xff] %v869
    %903 = vst [vmem:[#allocation10 + $0xb8] sm:$0xff] %v872
    %904 = vst [vmem:[#allocation10 + $0xc0] sm:$0xff] %v875
    %905 = vst [vmem:[#allocation10 + $0xc8] sm:$0xff] %v878
    // Predicated region
    $region42: #{tpu_custom_call.1} parent=1 // pred_check
      _
    $region43: #{tpu_custom_call.1} parent=1 // pred_check_branch
      %907 = sbr.rel (0) target = $region45
    $region44: #{tpu_custom_call.1} parent=1 // pred_region
      %909 = vsyncadd [#allocation4], 0
      %s910 = sshll.u32 [#allocation10], 4
      %s911 = int_to_ptr.vmem [resolvable:$true] %s910
      %s912 = sshll.u32 %s6, 4
      %s913 = int_to_ptr.hbm [resolvable:$true] %s912
      %918 = dma.vmem_to_hbm [thread:$0]  %s911, 3328, %s913, [#allocation4], 128, 128, 8
    $region45: #{tpu_custom_call.1} parent=1 // pred_fallthru
      _
    // Predicated region
    $region46: #{tpu_custom_call.1} parent=1 // pred_check
      _
    $region47: #{tpu_custom_call.1} parent=1 // pred_check_branch
      %920 = sbr.rel (0) target = $region49
    $region48: #{tpu_custom_call.1} parent=1 // pred_region
      %922 = dma.done [#allocation4], 3328
    $region49: #{tpu_custom_call.1} parent=1 // pred_fallthru
      _
    %923 = vsyncpa [#allocation3], 1
    %924 = vsyncpa [#allocation6], 1
    %925 = vsyncpa [#allocation9], 1
    %926 = vsyncpa [#allocation4], 1

</llo_original>
